<compile_context>
chip_gen: v7x
topology: tpu7x:2x2x1
jax: 0.10.0
libtpu: 0.0.40
codegen_flags: <defaults>
</compile_context>

<pallas_src>
import math

import jax
import jax.numpy as jnp
from jax.experimental import pallas as pl
from jax.experimental.pallas import tpu as pltpu

LRELU_SLOPE = 0.1
_COMPUTE_DTYPE = jnp.bfloat16          # MXU operand dtype (f32 accumulation)


def _pick_vmem_limit():
    # 128 MiB physical on v5e/v6e -> 64 MiB limit; 64 MiB/TC on v7x -> 32 MiB.
    try:
        cap = int(pltpu.get_tpu_info().vmem_capacity_bytes)
    except Exception:
        cap = 64 * 1024 * 1024
    return max(32 * 1024 * 1024, min(cap // 2, 100 * 1024 * 1024))


_VMEM_LIMIT = _pick_vmem_limit()


def _compiler_params(dim_semantics):
    return pltpu.CompilerParams(dimension_semantics=dim_semantics,
                                vmem_limit_bytes=_VMEM_LIMIT)


def _n_tile(cout):
    # Cout tile: keep big (1024/512) layers' weight blocks small for VMEM.
    return 256 if cout > 256 else cout


# ----------------------------------------------------------------------------
# Glue: phase decomposition so every in-kernel tap is a contiguous slice
# ----------------------------------------------------------------------------
def _phase_decompose(x_cl, K, S, P):
    """Channel-last (B,H,W,C) -> (B, S, U*W, C) with
    x_ph[b, r, u*W + w, c] = x_padded[b, u*S + r, w, c]."""
    B, H, W, C = x_cl.shape
    H_out = (H + 2 * P - K) // S + 1
    qmax = (K - 1) // S
    U = max(H_out + qmax, -(-(H + P) // S))
    x_pad = jnp.pad(x_cl, ((0, 0), (P, S * U - P - H), (0, 0), (0, 0)))
    x_ph = (x_pad.reshape(B, U, S, W, C)
                 .transpose(0, 2, 1, 3, 4)
                 .reshape(B, S, U * W, C))
    return x_ph, H_out, U


# ----------------------------------------------------------------------------
# Kernels
# ----------------------------------------------------------------------------
def _make_conv_kernel(K, S, W, MW, Cin, apply_act):
    """Dense (K,1)-conv (stride S along H) + optional leaky relu for one
    (batch, Cout-tile) grid step.  Weight ref is the tap-concatenated
    (K*Cin, TN) layout."""

    def kernel(x_ref, w_ref, b_ref, o_ref):
        TN = o_ref.shape[-1]
        if Cin >= 128:
            # Tap-concat -> ONE MXU matmul: (MW, K*Cin) @ (K*Cin, TN).
            xcat = jnp.concatenate(
                [x_ref[0, k % S, (k // S) * W:(k // S) * W + MW, :]
                 for k in range(K)], axis=-1)
            acc = jnp.dot(xcat, w_ref[...], preferred_element_type=jnp.float32)
        elif Cin >= 8:
            # One MXU matmul per tap (Cin=32 layer).
            acc = jnp.zeros((MW, TN), jnp.float32)
            for k in range(K):
                r, q = k % S, k // S
                xk = x_ref[0, r, q * W:q * W + MW, :]
                wk = w_ref[k * Cin:(k + 1) * Cin, :]
                acc = acc + jnp.dot(xk, wk, preferred_element_type=jnp.float32)
        else:
            # Contraction too small for the MXU -> VPU outer products (Cin=1).
            acc = jnp.zeros((MW, TN), jnp.float32)
            for k in range(K):
                r, q = k % S, k // S
                xk = x_ref[0, r, q * W:q * W + MW, :]
                wk = w_ref[k * Cin:(k + 1) * Cin, :]
                for c in range(Cin):
                    acc = acc + (xk[:, c:c + 1].astype(jnp.float32) *
                                 wk[c:c + 1, :].astype(jnp.float32))
        y = acc + b_ref[...]
        if apply_act:
            y = jnp.where(y >= 0, y, LRELU_SLOPE * y)
        o_ref[...] = y[None].astype(o_ref.dtype)

    return kernel


def _make_fused_last_kernel(K, S, W, MW, Kp, n_tiles):
    """Last conv (1024->1024) + leaky relu + fused conv_post (1024->1, K=Kp).

    conv_post partials are one (MW, TN) x (TN, Kp) MXU matmul per Cout tile,
    accumulated into a VMEM scratch with a (Kp-1)/2 * W zero row margin on each
    side; the Kp row-shifted tap columns are summed once at the last Cout tile
    and op_ref is stored exactly once (no per-tap read-modify-write)."""
    pc = (Kp - 1) // 2
    off = pc * W                                   # zero-margin rows each side

    def kernel(x_ref, w_ref, b_ref, wp_ref, o_ref, op_ref, acc_post):
        n = pl.program_id(1)
        xcat = jnp.concatenate(
            [x_ref[0, k % S, (k // S) * W:(k // S) * W + MW, :]
             for k in range(K)], axis=-1)
        y = jnp.dot(xcat, w_ref[...], preferred_element_type=jnp.float32)
        y = y + b_ref[...]
        y = jnp.where(y >= 0, y, LRELU_SLOPE * y)   # leaky_relu(conv5)
        o_ref[...] = y[None].astype(o_ref.dtype)

        # conv_post partial for this Cout tile (bias added in the wrapper).
        part = jnp.dot(y.astype(_COMPUTE_DTYPE), wp_ref[...],
                       preferred_element_type=jnp.float32)       # (MW, Kp)

        @pl.when(n == 0)
        def _():
            acc_post[...] = jnp.zeros_like(acc_post)

        acc_post[off:off + MW, :] = acc_post[off:off + MW, :] + part

        @pl.when(n == n_tiles - 1)
        def _():
            # post[m] = sum_k acc_post[m + k*W, k]; margins are zero => the
            # zero-padding of the K=3 conv along H falls out automatically.
            res = acc_post[0:MW, 0:1]
            for k in range(1, Kp):
                res = res + acc_post[k * W:k * W + MW, k:k + 1]
            op_ref[...] = res[None].astype(op_ref.dtype)

    return kernel


# ----------------------------------------------------------------------------
# Wrappers: one Conv2d((K,1)) [+ leaky relu] == one pallas_call
# ----------------------------------------------------------------------------
def conv_kx1_pallas(x_cl, w, b, stride, padding, apply_act=True):
    """x_cl channel-last (B,H,W,Cin) -> channel-last (B,H_out,W,Cout) bf16."""
    B, H, W, Cin = x_cl.shape
    Cout, Cin_w, K = w.shape
    assert Cin_w == Cin
    S, P = stride, padding
    x_ph, H_out, U = _phase_decompose(x_cl.astype(_COMPUTE_DTYPE), K, S, P)
    MW, UW = H_out * W, U * W
    TN = _n_tile(Cout)
    n_tiles = Cout // TN
    w_cat = (jnp.transpose(w, (2, 1, 0))
             .reshape(K * Cin, Cout).astype(_COMPUTE_DTYPE))     # (K*Cin, Cout)
    b_ph = b.reshape(1, Cout).astype(jnp.float32)

    out = pl.pallas_call(
        _make_conv_kernel(K, S, W, MW, Cin, apply_act),
        out_shape=jax.ShapeDtypeStruct((B, MW, Cout), _COMPUTE_DTYPE),
        grid=(B, n_tiles),
        in_specs=[
            pl.BlockSpec((1, S, UW, Cin), lambda i, n: (i, 0, 0, 0)),
            pl.BlockSpec((K * Cin, TN), lambda i, n: (0, n)),
            pl.BlockSpec((1, TN), lambda i, n: (0, n)),
        ],
        out_specs=pl.BlockSpec((1, MW, TN), lambda i, n: (i, 0, n)),
        compiler_params=_compiler_params(("parallel", "parallel")),
    )(x_ph, w_cat, b_ph)
    return out.reshape(B, H_out, W, Cout)


def conv_last_fused_pallas(x_cl, w, b, wp, bp, stride, padding):
    """Final 1024->1024 conv + leaky relu + conv_post (1024->1) in one call."""
    B, H, W, Cin = x_cl.shape
    Cout, _, K = w.shape
    Kp = wp.shape[-1]
    S, P = stride, padding
    x_ph, H_out, U = _phase_decompose(x_cl.astype(_COMPUTE_DTYPE), K, S, P)
    MW, UW = H_out * W, U * W
    TN = _n_tile(Cout)
    n_tiles = Cout // TN
    w_cat = (jnp.transpose(w, (2, 1, 0))
             .reshape(K * Cin, Cout).astype(_COMPUTE_DTYPE))     # (K*Cin, Cout)
    b_ph = b.reshape(1, Cout).astype(jnp.float32)
    wp_ph = wp[0].astype(_COMPUTE_DTYPE)                         # (Cin, Kp)

    out5, outp = pl.pallas_call(
        _make_fused_last_kernel(K, S, W, MW, Kp, n_tiles),
        out_shape=(jax.ShapeDtypeStruct((B, MW, Cout), _COMPUTE_DTYPE),
                   jax.ShapeDtypeStruct((B, MW, 1), jnp.float32)),
        grid=(B, n_tiles),
        in_specs=[
            pl.BlockSpec((1, S, UW, Cin), lambda i, n: (i, 0, 0, 0)),
            pl.BlockSpec((K * Cin, TN), lambda i, n: (0, n)),
            pl.BlockSpec((1, TN), lambda i, n: (0, n)),
            pl.BlockSpec((TN, Kp), lambda i, n: (n, 0)),
        ],
        out_specs=(pl.BlockSpec((1, MW, TN), lambda i, n: (i, 0, n)),
                   pl.BlockSpec((1, MW, 1), lambda i, n: (i, 0, 0))),
        scratch_shapes=[pltpu.VMEM((MW + (Kp - 1) * W, Kp), jnp.float32)],
        compiler_params=_compiler_params(("parallel", "arbitrary")),
    )(x_ph, w_cat, b_ph, wp_ph)

    h5 = out5.reshape(B, H_out, W, Cout)
    post = (outp[..., 0] + bp[0]).reshape(B, H_out, W)           # conv_post bias
    return h5, post


# ----------------------------------------------------------------------------
# Module: parameters + forward
# ----------------------------------------------------------------------------
_KERNEL_SIZE, _STRIDE = 5, 3


def _get_padding(kernel_size, dilation=1):
    return (kernel_size * dilation - dilation) // 2


_CONV_CFGS = [
    # (cin, cout, kernel, stride, padding)  -- kernel/stride are along H only
    (1, 32, _KERNEL_SIZE, _STRIDE, _get_padding(_KERNEL_SIZE)),
    (32, 128, _KERNEL_SIZE, _STRIDE, _get_padding(_KERNEL_SIZE)),
    (128, 512, _KERNEL_SIZE, _STRIDE, _get_padding(_KERNEL_SIZE)),
    (512, 1024, _KERNEL_SIZE, _STRIDE, _get_padding(_KERNEL_SIZE)),
    (1024, 1024, _KERNEL_SIZE, 1, _get_padding(_KERNEL_SIZE)),
]
_POST_CFG = (1024, 1, 3, 1, 1)


def init_params(key):
    """weight_norm is identity at init -> folded into plain (Cout, Cin, K) weights."""
    params = {"convs": [], "conv_post": None}
    all_cfgs = _CONV_CFGS + [_POST_CFG]
    for idx, (cin, cout, k, stride, pad) in enumerate(all_cfgs):
        key, kw, kb = jax.random.split(key, 3)
        fan_in = cin * k
        std = 1.0 / math.sqrt(fan_in)
        w = std * jax.random.normal(kw, (cout, cin, k), jnp.float32)
        b = std * jax.random.normal(kb, (cout,), jnp.float32)
        entry = (w, b, stride, pad)
        if idx == len(all_cfgs) - 1:
            params["conv_post"] = entry
        else:
            params["convs"].append(entry)
    return params


def discriminator_p_forward(x, params, period):
    """Mirrors VITSDiscriminatorP.forward: returns (flattened logits, fmap)."""
    B, C, T = x.shape
    if T % period != 0:                       # reflect-pad T to a multiple of period
        n_pad = period - T % period
        x = jnp.pad(x, ((0, 0), (0, 0), (0, n_pad)), mode="reflect")
        T = T + n_pad
    H, W = T // period, period
    h = x.reshape(B, C, H, W).transpose(0, 2, 3, 1)     # channel-last (B, H, W, 1)

    fmap = []
    convs = params["convs"]
    for (w, b, s, p) in convs[:-1]:
        h = conv_kx1_pallas(h, w, b, s, p, apply_act=True)   # conv + leaky relu
        # NCHW + f32 only materialized for the returned fmap tensors
        fmap.append(jnp.transpose(h, (0, 3, 1, 2)).astype(jnp.float32))
    w5, b5, s5, p5 = convs[-1]
    wp, bp, _, _ = params["conv_post"]
    h5, post = conv_last_fused_pallas(h, w5, b5, wp, bp, s5, p5)
    fmap.append(jnp.transpose(h5, (0, 3, 1, 2)).astype(jnp.float32))
    fmap.append(post[:, None, :, :])                         # (B, 1, H_out, W)
    logits = post.reshape(B, -1)                             # torch.flatten(x, 1, -1)
    return logits, fmap


# ----------------------------------------------------------------------------
# Pure-JAX reference (for correctness check only)
# ----------------------------------------------------------------------------
def _conv2d_ref(x, w, b, stride, padding, compute_dtype=None):
    w4 = w[..., None]                                        # (Cout, Cin, K, 1)
    if compute_dtype is not None:
        x, w4 = x.astype(compute_dtype), w4.astype(compute_dtype)
    out = jax.lax.conv_general_dilated(
        x, w4, window_strides=(stride, 1),
        padding=[(padding, padding), (0, 0)],
        dimension_numbers=("NCHW", "OIHW", "NCHW"),
        preferred_element_type=jnp.float32,
        precision=jax.lax.Precision.HIGHEST)
    return out + b[None, :, None, None]


def _forward_ref(x, params, period):
    B, C, T = x.shape
    if T % period != 0:
        n_pad = period - T % period
        x = jnp.pad(x, ((0, 0), (0, 0), (0, n_pad)), mode="reflect")
        T = T + n_pad
    h = x.reshape(B, C, T // period, period)
    fmap = []
    for (w, b, s, p) in params["convs"]:
        h = _conv2d_ref(h, w, b, s, p, compute_dtype=_COMPUTE_DTYPE)
        h = jnp.where(h >= 0, h, LRELU_SLOPE * h)
        # mirror the bf16 chain storage of the Pallas pipeline
        h = h.astype(_COMPUTE_DTYPE).astype(jnp.float32)
        fmap.append(h)
    (w, b, s, p) = params["conv_post"]
    h = _conv2d_ref(h, w, b, s, p, compute_dtype=_COMPUTE_DTYPE)
    fmap.append(h)
    return h.reshape(h.shape[0], -1), fmap


# ----------------------------------------------------------------------------
if __name__ == "__main__":
    key = jax.random.PRNGKey(0)
    kp, kx = jax.random.split(key)
    params = init_params(kp)

    B, T, period = 2, 256, 3
    x = jax.random.normal(kx, (B, 1, T), jnp.float32)

    logits, fmap = discriminator_p_forward(x, params, period)
    logits = jax.block_until_ready(logits)
    fmap = [jax.block_until_ready(f) for f in fmap]

    logits_ref, fmap_ref = _forward_ref(x, params, period)
    assert logits.shape == logits_ref.shape, (logits.shape, logits_ref.shape)
    for a, r in zip([logits] + fmap, [logits_ref] + fmap_ref):
        assert a.shape == r.shape, (a.shape, r.shape)
        err = float(jnp.max(jnp.abs(a - r)))
        assert jnp.allclose(a, r, rtol=1e-2, atol=1e-2), (a.shape, err)

    print("KERNEL_OK")
</pallas_src>

<mosaic_0001>
module attributes {stable_mosaic.version = 11 : i64} {
  func.func @kernel(%arg0: i32, %arg1: i32, %arg2: memref<1x3x90x1xbf16, #tpu.memory_space<vmem>>, %arg3: memref<5x32xbf16, #tpu.memory_space<vmem>>, %arg4: memref<1x32xf32, #tpu.memory_space<vmem>>, %arg5: memref<1x87x32xbf16, #tpu.memory_space<vmem>>) attributes {dimension_semantics = [#tpu.dimension_semantics<parallel>, #tpu.dimension_semantics<parallel>], iteration_bounds = array<i64: 2, 1>, scalar_prefetch = 0 : i64, scratch_operands = 0 : i64, tpu.core_type = #tpu.core_type<tc>, window_params = [{transform_indices = @transform_0, window_bounds = array<i64: 1, 3, 90, 1>}, {transform_indices = @transform_1, window_bounds = array<i64: 5, 32>}, {transform_indices = @transform_2, window_bounds = array<i64: 1, 32>}, {transform_indices = @transform_3, window_bounds = array<i64: 1, 87, 32>}]} {
    %cst = arith.constant 0.000000e+00 : f32
    %0 = vector.broadcast %cst : f32 to vector<87x32xf32>
    %c0 = arith.constant 0 : index
    %c0_0 = arith.constant 0 : index
    %c0_1 = arith.constant 0 : index
    %c0_2 = arith.constant 0 : index
    %1 = vector.load %arg2[%c0, %c0_0, %c0_1, %c0_2] : memref<1x3x90x1xbf16, #tpu.memory_space<vmem>>, vector<1x1x87x1xbf16>
    %2 = vector.shape_cast %1 : vector<1x1x87x1xbf16> to vector<87x1xbf16>
    %c0_3 = arith.constant 0 : index
    %c0_4 = arith.constant 0 : index
    %3 = vector.load %arg3[%c0_3, %c0_4] : memref<5x32xbf16, #tpu.memory_space<vmem>>, vector<1x32xbf16>
    %4 = arith.extf %2 : vector<87x1xbf16> to vector<87x1xf32>
    %5 = arith.extf %3 : vector<1x32xbf16> to vector<1x32xf32>
    %6 = vector.broadcast %4 : vector<87x1xf32> to vector<87x32xf32>
    %7 = vector.broadcast %5 : vector<1x32xf32> to vector<87x32xf32>
    %8 = arith.mulf %6, %7 : vector<87x32xf32>
    %9 = arith.addf %0, %8 : vector<87x32xf32>
    %c0_5 = arith.constant 0 : index
    %c1 = arith.constant 1 : index
    %c0_6 = arith.constant 0 : index
    %c0_7 = arith.constant 0 : index
    %10 = vector.load %arg2[%c0_5, %c1, %c0_6, %c0_7] : memref<1x3x90x1xbf16, #tpu.memory_space<vmem>>, vector<1x1x87x1xbf16>
    %11 = vector.shape_cast %10 : vector<1x1x87x1xbf16> to vector<87x1xbf16>
    %c1_8 = arith.constant 1 : index
    %c0_9 = arith.constant 0 : index
    %12 = vector.load %arg3[%c1_8, %c0_9] : memref<5x32xbf16, #tpu.memory_space<vmem>>, vector<1x32xbf16>
    %13 = arith.extf %11 : vector<87x1xbf16> to vector<87x1xf32>
    %14 = arith.extf %12 : vector<1x32xbf16> to vector<1x32xf32>
    %15 = vector.broadcast %13 : vector<87x1xf32> to vector<87x32xf32>
    %16 = vector.broadcast %14 : vector<1x32xf32> to vector<87x32xf32>
    %17 = arith.mulf %15, %16 : vector<87x32xf32>
    %18 = arith.addf %9, %17 : vector<87x32xf32>
    %c0_10 = arith.constant 0 : index
    %c2 = arith.constant 2 : index
    %c0_11 = arith.constant 0 : index
    %c0_12 = arith.constant 0 : index
    %19 = vector.load %arg2[%c0_10, %c2, %c0_11, %c0_12] : memref<1x3x90x1xbf16, #tpu.memory_space<vmem>>, vector<1x1x87x1xbf16>
    %20 = vector.shape_cast %19 : vector<1x1x87x1xbf16> to vector<87x1xbf16>
    %c2_13 = arith.constant 2 : index
    %c0_14 = arith.constant 0 : index
    %21 = vector.load %arg3[%c2_13, %c0_14] : memref<5x32xbf16, #tpu.memory_space<vmem>>, vector<1x32xbf16>
    %22 = arith.extf %20 : vector<87x1xbf16> to vector<87x1xf32>
    %23 = arith.extf %21 : vector<1x32xbf16> to vector<1x32xf32>
    %24 = vector.broadcast %22 : vector<87x1xf32> to vector<87x32xf32>
    %25 = vector.broadcast %23 : vector<1x32xf32> to vector<87x32xf32>
    %26 = arith.mulf %24, %25 : vector<87x32xf32>
    %27 = arith.addf %18, %26 : vector<87x32xf32>
    %c0_15 = arith.constant 0 : index
    %c0_16 = arith.constant 0 : index
    %c3 = arith.constant 3 : index
    %c0_17 = arith.constant 0 : index
    %28 = vector.load %arg2[%c0_15, %c0_16, %c3, %c0_17] : memref<1x3x90x1xbf16, #tpu.memory_space<vmem>>, vector<1x1x87x1xbf16>
    %29 = vector.shape_cast %28 : vector<1x1x87x1xbf16> to vector<87x1xbf16>
    %c3_18 = arith.constant 3 : index
    %c0_19 = arith.constant 0 : index
    %30 = vector.load %arg3[%c3_18, %c0_19] : memref<5x32xbf16, #tpu.memory_space<vmem>>, vector<1x32xbf16>
    %31 = arith.extf %29 : vector<87x1xbf16> to vector<87x1xf32>
    %32 = arith.extf %30 : vector<1x32xbf16> to vector<1x32xf32>
    %33 = vector.broadcast %31 : vector<87x1xf32> to vector<87x32xf32>
    %34 = vector.broadcast %32 : vector<1x32xf32> to vector<87x32xf32>
    %35 = arith.mulf %33, %34 : vector<87x32xf32>
    %36 = arith.addf %27, %35 : vector<87x32xf32>
    %c0_20 = arith.constant 0 : index
    %c1_21 = arith.constant 1 : index
    %c3_22 = arith.constant 3 : index
    %c0_23 = arith.constant 0 : index
    %37 = vector.load %arg2[%c0_20, %c1_21, %c3_22, %c0_23] : memref<1x3x90x1xbf16, #tpu.memory_space<vmem>>, vector<1x1x87x1xbf16>
    %38 = vector.shape_cast %37 : vector<1x1x87x1xbf16> to vector<87x1xbf16>
    %c4 = arith.constant 4 : index
    %c0_24 = arith.constant 0 : index
    %39 = vector.load %arg3[%c4, %c0_24] : memref<5x32xbf16, #tpu.memory_space<vmem>>, vector<1x32xbf16>
    %40 = arith.extf %38 : vector<87x1xbf16> to vector<87x1xf32>
    %41 = arith.extf %39 : vector<1x32xbf16> to vector<1x32xf32>
    %42 = vector.broadcast %40 : vector<87x1xf32> to vector<87x32xf32>
    %43 = vector.broadcast %41 : vector<1x32xf32> to vector<87x32xf32>
    %44 = arith.mulf %42, %43 : vector<87x32xf32>
    %45 = arith.addf %36, %44 : vector<87x32xf32>
    %c0_25 = arith.constant 0 : index
    %c0_26 = arith.constant 0 : index
    %46 = vector.load %arg4[%c0_25, %c0_26] : memref<1x32xf32, #tpu.memory_space<vmem>>, vector<1x32xf32>
    %47 = vector.broadcast %46 : vector<1x32xf32> to vector<87x32xf32>
    %48 = arith.addf %45, %47 : vector<87x32xf32>
    %cst_27 = arith.constant 0.000000e+00 : f32
    %49 = vector.broadcast %cst_27 : f32 to vector<87x32xf32>
    %50 = arith.cmpf oge, %48, %49 : vector<87x32xf32>
    %cst_28 = arith.constant 1.000000e-01 : f32
    %51 = vector.broadcast %cst_28 : f32 to vector<87x32xf32>
    %52 = arith.mulf %51, %48 : vector<87x32xf32>
    %53 = arith.select %50, %48, %52 : vector<87x32xi1>, vector<87x32xf32>
    %54 = vector.shape_cast %53 : vector<87x32xf32> to vector<1x87x32xf32>
    %55 = arith.truncf %54 : vector<1x87x32xf32> to vector<1x87x32xbf16>
    %c0_29 = arith.constant 0 : index
    %c0_30 = arith.constant 0 : index
    %c0_31 = arith.constant 0 : index
    %56 = vector.load %arg5[%c0_29, %c0_30, %c0_31] : memref<1x87x32xbf16, #tpu.memory_space<vmem>>, vector<1x87x32xbf16>
    tpu.vector_store %arg5[%c0_29, %c0_30, %c0_31], %55 {strides = array<i32>} : memref<1x87x32xbf16, #tpu.memory_space<vmem>>, vector<1x87x32xbf16>,
    return
  }
  func.func @transform_0(%arg0: i32, %arg1: i32) -> (i32, i32, i32, i32) {
    %c0_i32 = arith.constant 0 : i32
    %c0_i32_0 = arith.constant 0 : i32
    %c0_i32_1 = arith.constant 0 : i32
    %c0_i32_2 = arith.constant 0 : i32
    return %arg0, %c0_i32, %c0_i32_0, %c0_i32_1 : i32, i32, i32, i32
  }
  func.func @transform_1(%arg0: i32, %arg1: i32) -> (i32, i32) {
    %c0_i32 = arith.constant 0 : i32
    %c0_i32_0 = arith.constant 0 : i32
    return %c0_i32, %arg1 : i32, i32
  }
  func.func @transform_2(%arg0: i32, %arg1: i32) -> (i32, i32) {
    %c0_i32 = arith.constant 0 : i32
    %c0_i32_0 = arith.constant 0 : i32
    return %c0_i32, %arg1 : i32, i32
  }
  func.func @transform_3(%arg0: i32, %arg1: i32) -> (i32, i32, i32) {
    %c0_i32 = arith.constant 0 : i32
    %c0_i32_0 = arith.constant 0 : i32
    return %arg0, %c0_i32, %arg1 : i32, i32, i32
  }
}

</mosaic_0001>

<llo_original>
// kernel: tpu_custom_call.1
$region0: #{tpu_custom_call.1}
  #allocation0 [shape = 'u32[]', space=smem, size = 0x4, offset = 0x4, fixed_abs, tag = 'smem constant byte address 0x4 - core index']
  #allocation1 [shape = 'u32[144,128]{1,0:T(1,128)}', space=vmem, size = 0x12000, scoped, tag = 'internal scratch']
  %s0 = inlined_call_operand.vmem [shape: bf16[2,3,90,1], index: 0, kind: input, shape index: {}]
  %s1 = inlined_call_operand.vmem [shape: bf16[5,32], index: 1, kind: input, shape index: {}]
  %s2 = inlined_call_operand.vmem [shape: f32[1,32], index: 2, kind: input, shape index: {}]
  %s3 = inlined_call_operand.vmem [shape: bf16[2,87,32], index: 3, kind: output, shape index: {}]
  %s4 = sld [smem:[#allocation0]]
  $region45: #{tpu_custom_call.1} parent=0
    _
  %s6 = ssub.s32 1, %s4
  %s7 = scalar_select 0, %s6, %s4
  loop: start=0, step=1, limit=4
  $region2: #{tpu_custom_call.1} parent=0 // loop_pre_header
    _
  $region3: #{tpu_custom_call.1} parent=0 // loop_header
    %s9 = sphi 0, %s13
    %p10 = scmp.ge.s32.totalorder %s9, 4
    %s16 = sphi 0, %s28
    %s17 = sphi 0, %s24
    %s18 = sphi 0, %s16
    %s19 = sphi 0, %s17
    %s20 = sphi 0, %s18
    %s21 = sphi 0, %s19
    %s31 = sphi 0, %s33
    %s34 = sphi 0, %s31
    %s35 = sphi 0, %s34
    %s51 = sphi 0, %s35
    %s57 = sphi 0, %s59
    %s60 = sphi 0, %s57
    %s61 = sphi 0, %s60
    %s77 = sphi 0, %s61
    %s83 = sphi 0, %s85
    %s86 = sphi 0, %s83
    %s87 = sphi 0, %s86
    %s103 = sphi 0, %s87
    %s111 = sphi 0, %s113
    %s114 = sphi 0, %s111
    %s115 = sphi 0, %s114
    %s131 = sphi 0, %s115
  $region4: #{tpu_custom_call.1} parent=0 // loop_header_branch
    %12 = sbr.rel (%p10) target = $region8
  $region5: #{tpu_custom_call.1} parent=0 // loop_body
    %s14 = ssub.s32 %s9, 1
    %s15 = ssub.s32 %s9, 2
    %s22 = sadd.s32 1, %s17
    %p23 = scmp.ge.s32.totalorder %s22, 1
    %s24 = scalar_select %p23, 0, %s22
    %s25 = sadd.s32 1, %s16
    %s26 = scalar_select %p23, %s25, %s16
    %p27 = scmp.ge.s32.totalorder %s26, 2
    %s28 = scalar_select %p27, 0, %s26
    %s29 = ssub.s32 %s16, %s28
    %p30 = scmp.eq.s32.totalorder %s29, 0
    %s32 = sadd.s32 %s31, 1
    %s33 = scalar_select %p30, %s31, %s32
    %p36 = pneg %p30
    %p37 = scmp.eq.s32.totalorder %s9, 1
    %p38 = por %p36, %p37
    %p39 = scmp.ne.s32.totalorder %s31, %s34
    %p40 = scmp.eq.s32.totalorder %s9, 0
    %p41 = por %p39, %p40
    %p42 = scmp.ne.s32.totalorder %s31, %s34
    %p43 = scmp.eq.s32.totalorder %s14, 1
    %p44 = por %p42, %p43
    %p45 = scmp.ne.s32.totalorder %s34, %s35
    %p46 = scmp.eq.s32.totalorder %s14, 0
    %p47 = por %p45, %p46
    %p48 = scmp.ne.s32.totalorder %s34, %s35
    %p49 = scmp.eq.s32.totalorder %s15, 1
    %p50 = por %p48, %p49
    %p52 = scmp.ne.s32.totalorder %s35, %s51
    %p53 = scmp.eq.s32.totalorder %s15, 0
    %p54 = por %p52, %p53
    %s55 = ssub.s32 %s17, %s24
    %p56 = scmp.eq.s32.totalorder %s55, 0
    %s58 = sadd.s32 %s57, 1
    %s59 = scalar_select %p56, %s57, %s58
    %p62 = pneg %p56
    %p63 = scmp.eq.s32.totalorder %s9, 1
    %p64 = por %p62, %p63
    %p65 = scmp.ne.s32.totalorder %s57, %s60
    %p66 = scmp.eq.s32.totalorder %s9, 0
    %p67 = por %p65, %p66
    %p68 = scmp.ne.s32.totalorder %s57, %s60
    %p69 = scmp.eq.s32.totalorder %s14, 1
    %p70 = por %p68, %p69
    %p71 = scmp.ne.s32.totalorder %s60, %s61
    %p72 = scmp.eq.s32.totalorder %s14, 0
    %p73 = por %p71, %p72
    %p74 = scmp.ne.s32.totalorder %s60, %s61
    %p75 = scmp.eq.s32.totalorder %s15, 1
    %p76 = por %p74, %p75
    %p78 = scmp.ne.s32.totalorder %s61, %s77
    %p79 = scmp.eq.s32.totalorder %s15, 0
    %p80 = por %p78, %p79
    %s81 = ssub.s32 %s17, %s24
    %p82 = scmp.eq.s32.totalorder %s81, 0
    %s84 = sadd.s32 %s83, 1
    %s85 = scalar_select %p82, %s83, %s84
    %p88 = pneg %p82
    %p89 = scmp.eq.s32.totalorder %s9, 1
    %p90 = por %p88, %p89
    %p91 = scmp.ne.s32.totalorder %s83, %s86
    %p92 = scmp.eq.s32.totalorder %s9, 0
    %p93 = por %p91, %p92
    %p94 = scmp.ne.s32.totalorder %s83, %s86
    %p95 = scmp.eq.s32.totalorder %s14, 1
    %p96 = por %p94, %p95
    %p97 = scmp.ne.s32.totalorder %s86, %s87
    %p98 = scmp.eq.s32.totalorder %s14, 0
    %p99 = por %p97, %p98
    %p100 = scmp.ne.s32.totalorder %s86, %s87
    %p101 = scmp.eq.s32.totalorder %s15, 1
    %p102 = por %p100, %p101
    %p104 = scmp.ne.s32.totalorder %s87, %s103
    %p105 = scmp.eq.s32.totalorder %s15, 0
    %p106 = por %p104, %p105
    %s107 = ssub.s32 %s16, %s28
    %s108 = ssub.s32 %s17, %s24
    %s109 = sor.u32 %s107, %s108
    %p110 = scmp.eq.s32.totalorder %s109, 0
    %s112 = sadd.s32 %s111, 1
    %s113 = scalar_select %p110, %s111, %s112
    %p116 = pneg %p110
    %p117 = scmp.eq.s32.totalorder %s9, 1
    %p118 = por %p116, %p117
    %p119 = scmp.ne.s32.totalorder %s111, %s114
    %p120 = scmp.eq.s32.totalorder %s9, 0
    %p121 = por %p119, %p120
    %p122 = scmp.ne.s32.totalorder %s111, %s114
    %p123 = scmp.eq.s32.totalorder %s14, 1
    %p124 = por %p122, %p123
    %p125 = scmp.ne.s32.totalorder %s114, %s115
    %p126 = scmp.eq.s32.totalorder %s14, 0
    %p127 = por %p125, %p126
    %p128 = scmp.ne.s32.totalorder %s114, %s115
    %p129 = scmp.eq.s32.totalorder %s15, 1
    %p130 = por %p128, %p129
    %p132 = scmp.ne.s32.totalorder %s115, %s131
    %p133 = scmp.eq.s32.totalorder %s15, 0
    %p134 = por %p132, %p133
    %p135 = scmp.le.s32.totalorder 1, %s9
    %p136 = scmp.lt.s32.totalorder %s9, 3
    %p137 = pnand %p135, %p136
    %p138 = pneg %p137
    // Predicated region
    $region9: #{tpu_custom_call.1} parent=5 // pred_check
      _
    $region10: #{tpu_custom_call.1} parent=5 // pred_check_branch
      %140 = sbr.rel (%p137) target = $region12
    $region11: #{tpu_custom_call.1} parent=5 // pred_region
      %s141 = ssub.s32 %s9, 1
      // Predicated region
      $region13: #{tpu_custom_call.1} parent=11 // pred_check
        %p142 = pneg %p73
      $region14: #{tpu_custom_call.1} parent=11 // pred_check_branch
        %144 = sbr.rel (%p142) target = $region16
      $region15: #{tpu_custom_call.1} parent=11 // pred_region
        %p145 = scmp.lt.s32.totalorder %s19, 0
        %s146 = scalar_select %p145, %s19, 0
        %s147 = smul.addr %s146, 4
        %s148 = scalar_lea.vmem %s1, %s147
      $region16: #{tpu_custom_call.1} parent=11 // pred_fallthru
        _
      // Predicated region
      $region17: #{tpu_custom_call.1} parent=11 // pred_check
        %p149 = pneg %p99
      $region18: #{tpu_custom_call.1} parent=11 // pred_check_branch
        %151 = sbr.rel (%p149) target = $region20
      $region19: #{tpu_custom_call.1} parent=11 // pred_region
        %p152 = scmp.lt.s32.totalorder %s19, 0
        %s153 = scalar_select %p152, %s19, 0
        %s154 = scalar_lea.vmem %s2, %s153
      $region20: #{tpu_custom_call.1} parent=11 // pred_fallthru
        _
    $region12: #{tpu_custom_call.1} parent=5 // pred_fallthru
      _
    %p155 = scmp.lt.s32.totalorder %s9, 2
    // Predicated region
    $region21: #{tpu_custom_call.1} parent=5 // pred_check
      %p156 = pneg %p155
    $region22: #{tpu_custom_call.1} parent=5 // pred_check_branch
      %158 = sbr.rel (%p156) target = $region24
    $region23: #{tpu_custom_call.1} parent=5 // pred_region
      // Predicated region
      $region25: #{tpu_custom_call.1} parent=23 // pred_check
        %p159 = pneg %p41
      $region26: #{tpu_custom_call.1} parent=23 // pred_check_branch
        %161 = sbr.rel (%p159) target = $region28
      $region27: #{tpu_custom_call.1} parent=23 // pred_region
        %p162 = scmp.lt.s32.totalorder %s16, 1
        %s163 = scalar_select %p162, %s16, 1
        %s164 = smul.addr %s163, 36
        %s165 = smul.addr %s164, 4
        %s166 = scalar_lea.vmem %s0, %s165
      $region28: #{tpu_custom_call.1} parent=23 // pred_fallthru
        _
    $region24: #{tpu_custom_call.1} parent=5 // pred_fallthru
      _
    %p167 = scmp.le.s32.totalorder 1, %s9
    %p168 = scmp.lt.s32.totalorder %s9, 3
    %p169 = pnand %p167, %p168
    %p170 = pneg %p169
    // Predicated region
    $region29: #{tpu_custom_call.1} parent=5 // pred_check
      _
    $region30: #{tpu_custom_call.1} parent=5 // pred_check_branch
      %172 = sbr.rel (%p169) target = $region32
    $region31: #{tpu_custom_call.1} parent=5 // pred_region
      %s173 = ssub.s32 %s9, 1
      %p174 = scmp.lt.s32.totalorder %s18, 1
      %s175 = scalar_select %p174, %s18, 1
      %s176 = smul.addr %s175, 36
      %s177 = smul.addr %s176, 4
      %s178 = scalar_lea.vmem %s0, %s177
      %p179 = pneg %p47
      %p180 = pneg %p44
      %p181 = scmp.lt.s32.totalorder %s19, 0
      %s182 = scalar_select %p181, %s19, 0
      %s183 = smul.addr %s182, 4
      %s184 = scalar_lea.vmem %s1, %s183
      %p185 = pneg %p73
      %p186 = pneg %p70
      %p187 = scmp.lt.s32.totalorder %s19, 0
      %s188 = scalar_select %p187, %s19, 0
      %s189 = scalar_lea.vmem %s2, %s188
      %p190 = pneg %p99
      %p191 = pneg %p96
      %p192 = pneg %p127
      %p193 = pneg %p124
      %p194 = scmp.lt.s32.totalorder %s18, 1
      %s195 = scalar_select %p194, %s18, 1
      %p196 = scmp.lt.s32.totalorder %s19, 0
      %s197 = scalar_select %p196, %s19, 0
      %s198 = smul.addr %s195, 11
      %s199 = sadd.s32 %s197, %s198
      %s200 = smul.addr %s199, 4
      %s201 = scalar_lea.vmem %s3, %s200
      %p202 = scmp.lt.s32.totalorder %s18, 1
      %s203 = scalar_select %p202, %s18, 1
      %s204 = smul.addr %s203, 36
      %s205 = smul.addr %s204, 4
      %s206 = scalar_lea.vmem %s0, %s205
      %p207 = scmp.lt.s32.totalorder %s19, 0
      %s208 = scalar_select %p207, %s19, 0
      %s209 = smul.addr %s208, 4
      %s210 = scalar_lea.vmem %s1, %s209
      %p211 = scmp.lt.s32.totalorder %s19, 0
      %s212 = scalar_select %p211, %s19, 0
      %s213 = scalar_lea.vmem %s2, %s212
      %p214 = scmp.lt.s32.totalorder %s18, 1
      %s215 = scalar_select %p214, %s18, 1
      %p216 = scmp.lt.s32.totalorder %s19, 0
      %s217 = scalar_select %p216, %s19, 0
      %s218 = smul.addr %s215, 11
      %s219 = sadd.s32 %s217, %s218
      %s220 = smul.addr %s219, 4
      %s221 = scalar_lea.vmem %s3, %s220
      %v222 = vld [vmem:[%s206] sm:$0xf]
      %v223 = vld [vmem:[%s206 + $0x4] sm:$0xf]
      %v224 = vld [vmem:[%s206 + $0x8] sm:$0xf]
      %v225 = vld [vmem:[%s206 + $0xc] sm:$0xf]
      %v226 = vld [vmem:[%s206 + $0x10] sm:$0xf]
      %v227 = vld [vmem:[%s206 + $0x14] sm:$0xf]
      %v228 = vld [vmem:[%s206 + $0x18] sm:$0xf]
      %v229 = vld [vmem:[%s206 + $0x1c] sm:$0xf]
      %v230 = vld [vmem:[%s206 + $0x20] sm:$0xf]
      %v231 = vld [vmem:[%s206 + $0x24] sm:$0xf]
      %v232 = vld [vmem:[%s206 + $0x28] sm:$0xf]
      %v233 = vld [vmem:[%s210] sm:$0x1]
      %v234 = vunpack.c.l.bf16 %v222
      %v235 = vunpack.c.l.bf16 %v223
      %v236 = vunpack.c.l.bf16 %v224
      %v237 = vunpack.c.l.bf16 %v225
      %v238 = vunpack.c.l.bf16 %v226
      %v239 = vunpack.c.l.bf16 %v227
      %v240 = vunpack.c.l.bf16 %v228
      %v241 = vunpack.c.l.bf16 %v229
      %v242 = vunpack.c.l.bf16 %v230
      %v243 = vunpack.c.l.bf16 %v231
      %v244 = vunpack.c.l.bf16 %v232
      %v245 = vunpack.c.l.bf16 %v233
      %247 = vset.pattern.permute.xlu0 0
      %248 = vperm.xlu0 %247, %v234
      %v249 = vpop.permute.xlu0 %248
      %252 = vset.pattern.permute.xlu0 0
      %253 = vperm.xlu0 %252, %v235
      %v254 = vpop.permute.xlu0 %253
      %257 = vset.pattern.permute.xlu0 0
      %258 = vperm.xlu0 %257, %v236
      %v259 = vpop.permute.xlu0 %258
      %262 = vset.pattern.permute.xlu0 0
      %263 = vperm.xlu0 %262, %v237
      %v264 = vpop.permute.xlu0 %263
      %267 = vset.pattern.permute.xlu0 0
      %268 = vperm.xlu0 %267, %v238
      %v269 = vpop.permute.xlu0 %268
      %272 = vset.pattern.permute.xlu0 0
      %273 = vperm.xlu0 %272, %v239
      %v274 = vpop.permute.xlu0 %273
      %277 = vset.pattern.permute.xlu0 0
      %278 = vperm.xlu0 %277, %v240
      %v279 = vpop.permute.xlu0 %278
      %282 = vset.pattern.permute.xlu0 0
      %283 = vperm.xlu0 %282, %v241
      %v284 = vpop.permute.xlu0 %283
      %287 = vset.pattern.permute.xlu0 0
      %288 = vperm.xlu0 %287, %v242
      %v289 = vpop.permute.xlu0 %288
      %292 = vset.pattern.permute.xlu0 0
      %293 = vperm.xlu0 %292, %v243
      %v294 = vpop.permute.xlu0 %293
      %297 = vset.pattern.permute.xlu0 0
      %298 = vperm.xlu0 %297, %v244
      %v299 = vpop.permute.xlu0 %298
      %v301 = vlaneseq
      %v302 = vshrl.u32 %v301, 7
      %v303 = vsub.s32 0, %v302
      %v304 = vrot.slane %v245, %v303
      %v305 = vmul.f32 %v249, %v304
      %v306 = vmul.f32 %v254, %v304
      %v307 = vmul.f32 %v259, %v304
      %v308 = vmul.f32 %v264, %v304
      %v309 = vmul.f32 %v269, %v304
      %v310 = vmul.f32 %v274, %v304
      %v311 = vmul.f32 %v279, %v304
      %v312 = vmul.f32 %v284, %v304
      %v313 = vmul.f32 %v289, %v304
      %v314 = vmul.f32 %v294, %v304
      %v315 = vmul.f32 %v299, %v304
      %v316 = vadd.f32 %v305, 0.0
      %v317 = vadd.f32 %v306, 0.0
      %v318 = vadd.f32 %v307, 0.0
      %v319 = vadd.f32 %v308, 0.0
      %v320 = vadd.f32 %v309, 0.0
      %v321 = vadd.f32 %v310, 0.0
      %v322 = vadd.f32 %v311, 0.0
      %v323 = vadd.f32 %v312, 0.0
      %v324 = vadd.f32 %v313, 0.0
      %v325 = vadd.f32 %v314, 0.0
      %v326 = vadd.f32 %v315, 0.0
      %s327 = scalar_lea.vmem %s206, 48
      %v328 = vld [vmem:[%s327] sm:$0xf]
      %v329 = vld [vmem:[%s327 + $0x4] sm:$0xf]
      %v330 = vld [vmem:[%s327 + $0x8] sm:$0xf]
      %v331 = vld [vmem:[%s327 + $0xc] sm:$0xf]
      %v332 = vld [vmem:[%s327 + $0x10] sm:$0xf]
      %v333 = vld [vmem:[%s327 + $0x14] sm:$0xf]
      %v334 = vld [vmem:[%s327 + $0x18] sm:$0xf]
      %v335 = vld [vmem:[%s327 + $0x1c] sm:$0xf]
      %v336 = vld [vmem:[%s327 + $0x20] sm:$0xf]
      %v337 = vld [vmem:[%s327 + $0x24] sm:$0xf]
      %v338 = vld [vmem:[%s327 + $0x28] sm:$0xf]
      %v339 = vunpack.c.l.bf16 %v328
      %v340 = vunpack.c.l.bf16 %v329
      %v341 = vunpack.c.l.bf16 %v330
      %v342 = vunpack.c.l.bf16 %v331
      %v343 = vunpack.c.l.bf16 %v332
      %v344 = vunpack.c.l.bf16 %v333
      %v345 = vunpack.c.l.bf16 %v334
      %v346 = vunpack.c.l.bf16 %v335
      %v347 = vunpack.c.l.bf16 %v336
      %v348 = vunpack.c.l.bf16 %v337
      %v349 = vunpack.c.l.bf16 %v338
      %351 = vset.pattern.permute.xlu0 0
      %352 = vperm.xlu0 %351, %v339
      %v353 = vpop.permute.xlu0 %352
      %356 = vset.pattern.permute.xlu0 0
      %357 = vperm.xlu0 %356, %v340
      %v358 = vpop.permute.xlu0 %357
      %361 = vset.pattern.permute.xlu0 0
      %362 = vperm.xlu0 %361, %v341
      %v363 = vpop.permute.xlu0 %362
      %366 = vset.pattern.permute.xlu0 0
      %367 = vperm.xlu0 %366, %v342
      %v368 = vpop.permute.xlu0 %367
      %371 = vset.pattern.permute.xlu0 0
      %372 = vperm.xlu0 %371, %v343
      %v373 = vpop.permute.xlu0 %372
      %376 = vset.pattern.permute.xlu0 0
      %377 = vperm.xlu0 %376, %v344
      %v378 = vpop.permute.xlu0 %377
      %381 = vset.pattern.permute.xlu0 0
      %382 = vperm.xlu0 %381, %v345
      %v383 = vpop.permute.xlu0 %382
      %386 = vset.pattern.permute.xlu0 0
      %387 = vperm.xlu0 %386, %v346
      %v388 = vpop.permute.xlu0 %387
      %391 = vset.pattern.permute.xlu0 0
      %392 = vperm.xlu0 %391, %v347
      %v393 = vpop.permute.xlu0 %392
      %396 = vset.pattern.permute.xlu0 0
      %397 = vperm.xlu0 %396, %v348
      %v398 = vpop.permute.xlu0 %397
      %401 = vset.pattern.permute.xlu0 0
      %402 = vperm.xlu0 %401, %v349
      %v403 = vpop.permute.xlu0 %402
      %v405 = vlaneseq
      %v406 = vshrl.u32 %v405, 7
      %v407 = vsub.s32 1, %v406
      %v408 = vrot.slane %v245, %v407
      %v409 = vmul.f32 %v353, %v408
      %v410 = vmul.f32 %v358, %v408
      %v411 = vmul.f32 %v363, %v408
      %v412 = vmul.f32 %v368, %v408
      %v413 = vmul.f32 %v373, %v408
      %v414 = vmul.f32 %v378, %v408
      %v415 = vmul.f32 %v383, %v408
      %v416 = vmul.f32 %v388, %v408
      %v417 = vmul.f32 %v393, %v408
      %v418 = vmul.f32 %v398, %v408
      %v419 = vmul.f32 %v403, %v408
      %v420 = vadd.f32 %v316, %v409
      %v421 = vadd.f32 %v317, %v410
      %v422 = vadd.f32 %v318, %v411
      %v423 = vadd.f32 %v319, %v412
      %v424 = vadd.f32 %v320, %v413
      %v425 = vadd.f32 %v321, %v414
      %v426 = vadd.f32 %v322, %v415
      %v427 = vadd.f32 %v323, %v416
      %v428 = vadd.f32 %v324, %v417
      %v429 = vadd.f32 %v325, %v418
      %v430 = vadd.f32 %v326, %v419
      %s431 = scalar_lea.vmem %s206, 96
      %v432 = vld [vmem:[%s431] sm:$0xf]
      %v433 = vld [vmem:[%s431 + $0x4] sm:$0xf]
      %v434 = vld [vmem:[%s431 + $0x8] sm:$0xf]
      %v435 = vld [vmem:[%s431 + $0xc] sm:$0xf]
      %v436 = vld [vmem:[%s431 + $0x10] sm:$0xf]
      %v437 = vld [vmem:[%s431 + $0x14] sm:$0xf]
      %v438 = vld [vmem:[%s431 + $0x18] sm:$0xf]
      %v439 = vld [vmem:[%s431 + $0x1c] sm:$0xf]
      %v440 = vld [vmem:[%s431 + $0x20] sm:$0xf]
      %v441 = vld [vmem:[%s431 + $0x24] sm:$0xf]
      %v442 = vld [vmem:[%s431 + $0x28] sm:$0xf]
      %v443 = vld [vmem:[%s210] sm:$0x2]
      %v444 = vunpack.c.l.bf16 %v432
      %v445 = vunpack.c.l.bf16 %v433
      %v446 = vunpack.c.l.bf16 %v434
      %v447 = vunpack.c.l.bf16 %v435
      %v448 = vunpack.c.l.bf16 %v436
      %v449 = vunpack.c.l.bf16 %v437
      %v450 = vunpack.c.l.bf16 %v438
      %v451 = vunpack.c.l.bf16 %v439
      %v452 = vunpack.c.l.bf16 %v440
      %v453 = vunpack.c.l.bf16 %v441
      %v454 = vunpack.c.l.bf16 %v442
      %v455 = vunpack.c.l.bf16 %v443
      %457 = vset.pattern.permute.xlu0 0
      %458 = vperm.xlu0 %457, %v444
      %v459 = vpop.permute.xlu0 %458
      %462 = vset.pattern.permute.xlu0 0
      %463 = vperm.xlu0 %462, %v445
      %v464 = vpop.permute.xlu0 %463
      %467 = vset.pattern.permute.xlu0 0
      %468 = vperm.xlu0 %467, %v446
      %v469 = vpop.permute.xlu0 %468
      %472 = vset.pattern.permute.xlu0 0
      %473 = vperm.xlu0 %472, %v447
      %v474 = vpop.permute.xlu0 %473
      %477 = vset.pattern.permute.xlu0 0
      %478 = vperm.xlu0 %477, %v448
      %v479 = vpop.permute.xlu0 %478
      %482 = vset.pattern.permute.xlu0 0
      %483 = vperm.xlu0 %482, %v449
      %v484 = vpop.permute.xlu0 %483
      %487 = vset.pattern.permute.xlu0 0
      %488 = vperm.xlu0 %487, %v450
      %v489 = vpop.permute.xlu0 %488
      %492 = vset.pattern.permute.xlu0 0
      %493 = vperm.xlu0 %492, %v451
      %v494 = vpop.permute.xlu0 %493
      %497 = vset.pattern.permute.xlu0 0
      %498 = vperm.xlu0 %497, %v452
      %v499 = vpop.permute.xlu0 %498
      %502 = vset.pattern.permute.xlu0 0
      %503 = vperm.xlu0 %502, %v453
      %v504 = vpop.permute.xlu0 %503
      %507 = vset.pattern.permute.xlu0 0
      %508 = vperm.xlu0 %507, %v454
      %v509 = vpop.permute.xlu0 %508
      %v511 = vlaneseq
      %v512 = vshrl.u32 %v511, 7
      %v513 = vsub.s32 2, %v512
      %v514 = vrot.slane %v455, %v513
      %v515 = vmul.f32 %v459, %v514
      %v516 = vmul.f32 %v464, %v514
      %v517 = vmul.f32 %v469, %v514
      %v518 = vmul.f32 %v474, %v514
      %v519 = vmul.f32 %v479, %v514
      %v520 = vmul.f32 %v484, %v514
      %v521 = vmul.f32 %v489, %v514
      %v522 = vmul.f32 %v494, %v514
      %v523 = vmul.f32 %v499, %v514
      %v524 = vmul.f32 %v504, %v514
      %v525 = vmul.f32 %v509, %v514
      %v526 = vadd.f32 %v420, %v515
      %v527 = vadd.f32 %v421, %v516
      %v528 = vadd.f32 %v422, %v517
      %v529 = vadd.f32 %v423, %v518
      %v530 = vadd.f32 %v424, %v519
      %v531 = vadd.f32 %v425, %v520
      %v532 = vadd.f32 %v426, %v521
      %v533 = vadd.f32 %v427, %v522
      %v534 = vadd.f32 %v428, %v523
      %v535 = vadd.f32 %v429, %v524
      %v536 = vadd.f32 %v430, %v525
      %v537 = vld [vmem:[%s206] sm:$0xe]
      %v538 = vld [vmem:[%s206 + $0x4] sm:$0xf]
      %v539 = vld [vmem:[%s206 + $0x8] sm:$0xf]
      %v540 = vld [vmem:[%s206 + $0xc] sm:$0xf]
      %v541 = vld [vmem:[%s206 + $0x10] sm:$0xf]
      %v542 = vld [vmem:[%s206 + $0x14] sm:$0xf]
      %v543 = vld [vmem:[%s206 + $0x18] sm:$0xf]
      %v544 = vld [vmem:[%s206 + $0x1c] sm:$0xf]
      %v545 = vld [vmem:[%s206 + $0x20] sm:$0xf]
      %v546 = vld [vmem:[%s206 + $0x24] sm:$0xf]
      %v547 = vld [vmem:[%s206 + $0x28] sm:$0xf]
      %v548 = vld [vmem:[%s206 + $0x2c] sm:$0x1]
      %v549 = vunpack.c.l.bf16 %v537
      %v550 = vunpack.c.l.bf16 %v538
      %v551 = vunpack.c.l.bf16 %v539
      %v552 = vunpack.c.l.bf16 %v540
      %v553 = vunpack.c.l.bf16 %v541
      %v554 = vunpack.c.l.bf16 %v542
      %v555 = vunpack.c.l.bf16 %v543
      %v556 = vunpack.c.l.bf16 %v544
      %v557 = vunpack.c.l.bf16 %v545
      %v558 = vunpack.c.l.bf16 %v546
      %v559 = vunpack.c.l.bf16 %v547
      %v560 = vunpack.c.l.bf16 %v548
      %562 = vset.pattern.permute.xlu0 0
      %563 = vperm.xlu0 %562, %v549
      %v564 = vpop.permute.xlu0 %563
      %567 = vset.pattern.permute.xlu0 0
      %568 = vperm.xlu0 %567, %v550
      %v569 = vpop.permute.xlu0 %568
      %572 = vset.pattern.permute.xlu0 0
      %573 = vperm.xlu0 %572, %v551
      %v574 = vpop.permute.xlu0 %573
      %577 = vset.pattern.permute.xlu0 0
      %578 = vperm.xlu0 %577, %v552
      %v579 = vpop.permute.xlu0 %578
      %582 = vset.pattern.permute.xlu0 0
      %583 = vperm.xlu0 %582, %v553
      %v584 = vpop.permute.xlu0 %583
      %587 = vset.pattern.permute.xlu0 0
      %588 = vperm.xlu0 %587, %v554
      %v589 = vpop.permute.xlu0 %588
      %592 = vset.pattern.permute.xlu0 0
      %593 = vperm.xlu0 %592, %v555
      %v594 = vpop.permute.xlu0 %593
      %597 = vset.pattern.permute.xlu0 0
      %598 = vperm.xlu0 %597, %v556
      %v599 = vpop.permute.xlu0 %598
      %602 = vset.pattern.permute.xlu0 0
      %603 = vperm.xlu0 %602, %v557
      %v604 = vpop.permute.xlu0 %603
      %607 = vset.pattern.permute.xlu0 0
      %608 = vperm.xlu0 %607, %v558
      %v609 = vpop.permute.xlu0 %608
      %612 = vset.pattern.permute.xlu0 0
      %613 = vperm.xlu0 %612, %v559
      %v614 = vpop.permute.xlu0 %613
      %617 = vset.pattern.permute.xlu0 0
      %618 = vperm.xlu0 %617, %v560
      %v619 = vpop.permute.xlu0 %618
      %v621 = vlaneseq
      %v622 = vshrl.u32 %v621, 7
      %v623 = vsub.s32 3, %v622
      %v624 = vrot.slane %v455, %v623
      %v625 = vmul.f32 %v564, %v624
      %v626 = vmul.f32 %v569, %v624
      %v627 = vmul.f32 %v574, %v624
      %v628 = vmul.f32 %v579, %v624
      %v629 = vmul.f32 %v584, %v624
      %v630 = vmul.f32 %v589, %v624
      %v631 = vmul.f32 %v594, %v624
      %v632 = vmul.f32 %v599, %v624
      %v633 = vmul.f32 %v604, %v624
      %v634 = vmul.f32 %v609, %v624
      %v635 = vmul.f32 %v614, %v624
      %v636 = vmul.f32 %v619, %v624
      %vm649 = vcmask 1044480
      %v650 = vrot.slane %v625, 3
      %v651 = vrot.slane %v626, 3
      %v652 = vsel %vm649, %v650, %v651
      %v653 = vrot.slane %v627, 3
      %v654 = vsel %vm649, %v651, %v653
      %v655 = vrot.slane %v628, 3
      %v656 = vsel %vm649, %v653, %v655
      %v657 = vrot.slane %v629, 3
      %v658 = vsel %vm649, %v655, %v657
      %v659 = vrot.slane %v630, 3
      %v660 = vsel %vm649, %v657, %v659
      %v661 = vrot.slane %v631, 3
      %v662 = vsel %vm649, %v659, %v661
      %v663 = vrot.slane %v632, 3
      %v664 = vsel %vm649, %v661, %v663
      %v665 = vrot.slane %v633, 3
      %v666 = vsel %vm649, %v663, %v665
      %v667 = vrot.slane %v634, 3
      %v668 = vsel %vm649, %v665, %v667
      %v669 = vrot.slane %v635, 3
      %v670 = vsel %vm649, %v667, %v669
      %v671 = vrot.slane %v636, 3
      %v672 = vsel %vm649, %v669, %v671
      %v684 = vadd.f32 %v526, %v652
      %v685 = vadd.f32 %v527, %v654
      %v686 = vadd.f32 %v528, %v656
      %v687 = vadd.f32 %v529, %v658
      %v688 = vadd.f32 %v530, %v660
      %v689 = vadd.f32 %v531, %v662
      %v690 = vadd.f32 %v532, %v664
      %v691 = vadd.f32 %v533, %v666
      %v692 = vadd.f32 %v534, %v668
      %v693 = vadd.f32 %v535, %v670
      %v694 = vadd.f32 %v536, %v672
      %v695 = vld [vmem:[%s327] sm:$0xe]
      %v696 = vld [vmem:[%s327 + $0x4] sm:$0xf]
      %v697 = vld [vmem:[%s327 + $0x8] sm:$0xf]
      %v698 = vld [vmem:[%s327 + $0xc] sm:$0xf]
      %v699 = vld [vmem:[%s327 + $0x10] sm:$0xf]
      %v700 = vld [vmem:[%s327 + $0x14] sm:$0xf]
      %v701 = vld [vmem:[%s327 + $0x18] sm:$0xf]
      %v702 = vld [vmem:[%s327 + $0x1c] sm:$0xf]
      %v703 = vld [vmem:[%s327 + $0x20] sm:$0xf]
      %v704 = vld [vmem:[%s327 + $0x24] sm:$0xf]
      %v705 = vld [vmem:[%s327 + $0x28] sm:$0xf]
      %v706 = vld [vmem:[%s327 + $0x2c] sm:$0x1]
      %v707 = vld [vmem:[%s210] sm:$0x4]
      %v708 = vunpack.c.l.bf16 %v695
      %v709 = vunpack.c.l.bf16 %v696
      %v710 = vunpack.c.l.bf16 %v697
      %v711 = vunpack.c.l.bf16 %v698
      %v712 = vunpack.c.l.bf16 %v699
      %v713 = vunpack.c.l.bf16 %v700
      %v714 = vunpack.c.l.bf16 %v701
      %v715 = vunpack.c.l.bf16 %v702
      %v716 = vunpack.c.l.bf16 %v703
      %v717 = vunpack.c.l.bf16 %v704
      %v718 = vunpack.c.l.bf16 %v705
      %v719 = vunpack.c.l.bf16 %v706
      %v720 = vunpack.c.l.bf16 %v707
      %722 = vset.pattern.permute.xlu0 0
      %723 = vperm.xlu0 %722, %v708
      %v724 = vpop.permute.xlu0 %723
      %727 = vset.pattern.permute.xlu0 0
      %728 = vperm.xlu0 %727, %v709
      %v729 = vpop.permute.xlu0 %728
      %732 = vset.pattern.permute.xlu0 0
      %733 = vperm.xlu0 %732, %v710
      %v734 = vpop.permute.xlu0 %733
      %737 = vset.pattern.permute.xlu0 0
      %738 = vperm.xlu0 %737, %v711
      %v739 = vpop.permute.xlu0 %738
      %742 = vset.pattern.permute.xlu0 0
      %743 = vperm.xlu0 %742, %v712
      %v744 = vpop.permute.xlu0 %743
      %747 = vset.pattern.permute.xlu0 0
      %748 = vperm.xlu0 %747, %v713
      %v749 = vpop.permute.xlu0 %748
      %752 = vset.pattern.permute.xlu0 0
      %753 = vperm.xlu0 %752, %v714
      %v754 = vpop.permute.xlu0 %753
      %757 = vset.pattern.permute.xlu0 0
      %758 = vperm.xlu0 %757, %v715
      %v759 = vpop.permute.xlu0 %758
      %762 = vset.pattern.permute.xlu0 0
      %763 = vperm.xlu0 %762, %v716
      %v764 = vpop.permute.xlu0 %763
      %767 = vset.pattern.permute.xlu0 0
      %768 = vperm.xlu0 %767, %v717
      %v769 = vpop.permute.xlu0 %768
      %772 = vset.pattern.permute.xlu0 0
      %773 = vperm.xlu0 %772, %v718
      %v774 = vpop.permute.xlu0 %773
      %777 = vset.pattern.permute.xlu0 0
      %778 = vperm.xlu0 %777, %v719
      %v779 = vpop.permute.xlu0 %778
      %v781 = vlaneseq
      %v782 = vshrl.u32 %v781, 7
      %v783 = vsub.s32 4, %v782
      %v784 = vrot.slane %v720, %v783
      %v785 = vmul.f32 %v724, %v784
      %v786 = vmul.f32 %v729, %v784
      %v787 = vmul.f32 %v734, %v784
      %v788 = vmul.f32 %v739, %v784
      %v789 = vmul.f32 %v744, %v784
      %v790 = vmul.f32 %v749, %v784
      %v791 = vmul.f32 %v754, %v784
      %v792 = vmul.f32 %v759, %v784
      %v793 = vmul.f32 %v764, %v784
      %v794 = vmul.f32 %v769, %v784
      %v795 = vmul.f32 %v774, %v784
      %v796 = vmul.f32 %v779, %v784
      %v809 = vrot.slane %v785, 3
      %v810 = vrot.slane %v786, 3
      %v811 = vsel %vm649, %v809, %v810
      %v812 = vrot.slane %v787, 3
      %v813 = vsel %vm649, %v810, %v812
      %v814 = vrot.slane %v788, 3
      %v815 = vsel %vm649, %v812, %v814
      %v816 = vrot.slane %v789, 3
      %v817 = vsel %vm649, %v814, %v816
      %v818 = vrot.slane %v790, 3
      %v819 = vsel %vm649, %v816, %v818
      %v820 = vrot.slane %v791, 3
      %v821 = vsel %vm649, %v818, %v820
      %v822 = vrot.slane %v792, 3
      %v823 = vsel %vm649, %v820, %v822
      %v824 = vrot.slane %v793, 3
      %v825 = vsel %vm649, %v822, %v824
      %v826 = vrot.slane %v794, 3
      %v827 = vsel %vm649, %v824, %v826
      %v828 = vrot.slane %v795, 3
      %v829 = vsel %vm649, %v826, %v828
      %v830 = vrot.slane %v796, 3
      %v831 = vsel %vm649, %v828, %v830
      %v843 = vadd.f32 %v684, %v811
      %v844 = vadd.f32 %v685, %v813
      %v845 = vadd.f32 %v686, %v815
      %v846 = vadd.f32 %v687, %v817
      %v847 = vadd.f32 %v688, %v819
      %v848 = vadd.f32 %v689, %v821
      %v849 = vadd.f32 %v690, %v823
      %v850 = vadd.f32 %v691, %v825
      %v851 = vadd.f32 %v692, %v827
      %v852 = vadd.f32 %v693, %v829
      %v853 = vadd.f32 %v694, %v831
      %v854 = vld [vmem:[%s213] sm:$0x1]
      %v856 = vlaneseq
      %v857 = vshrl.u32 %v856, 7
      %v858 = vsub.s32 0, %v857
      %v859 = vrot.slane %v854, %v858
      %v861 = vadd.f32 %v843, %v859
      %v862 = vadd.f32 %v844, %v859
      %v863 = vadd.f32 %v845, %v859
      %v864 = vadd.f32 %v846, %v859
      %v865 = vadd.f32 %v847, %v859
      %v866 = vadd.f32 %v848, %v859
      %v867 = vadd.f32 %v849, %v859
      %v868 = vadd.f32 %v850, %v859
      %v869 = vadd.f32 %v851, %v859
      %v870 = vadd.f32 %v852, %v859
      %v871 = vadd.f32 %v853, %v859
      %vm872 = vcmp.ge.f32.partialorder %v861, 0.0
      %vm873 = vcmp.ge.f32.partialorder %v862, 0.0
      %vm874 = vcmp.ge.f32.partialorder %v863, 0.0
      %vm875 = vcmp.ge.f32.partialorder %v864, 0.0
      %vm876 = vcmp.ge.f32.partialorder %v865, 0.0
      %vm877 = vcmp.ge.f32.partialorder %v866, 0.0
      %vm878 = vcmp.ge.f32.partialorder %v867, 0.0
      %vm879 = vcmp.ge.f32.partialorder %v868, 0.0
      %vm880 = vcmp.ge.f32.partialorder %v869, 0.0
      %vm881 = vcmp.ge.f32.partialorder %v870, 0.0
      %vm882 = vcmp.ge.f32.partialorder %v871, 0.0
      %v883 = vmul.f32 %v861, 0.1
      %v884 = vmul.f32 %v862, 0.1
      %v885 = vmul.f32 %v863, 0.1
      %v886 = vmul.f32 %v864, 0.1
      %v887 = vmul.f32 %v865, 0.1
      %v888 = vmul.f32 %v866, 0.1
      %v889 = vmul.f32 %v867, 0.1
      %v890 = vmul.f32 %v868, 0.1
      %v891 = vmul.f32 %v869, 0.1
      %v892 = vmul.f32 %v870, 0.1
      %v893 = vmul.f32 %v871, 0.1
      %v894 = vsel %vm872, %v861, %v883
      %v895 = vsel %vm873, %v862, %v884
      %v896 = vsel %vm874, %v863, %v885
      %v897 = vsel %vm875, %v864, %v886
      %v898 = vsel %vm876, %v865, %v887
      %v899 = vsel %vm877, %v866, %v888
      %v900 = vsel %vm878, %v867, %v889
      %v901 = vsel %vm879, %v868, %v890
      %v902 = vsel %vm880, %v869, %v891
      %v903 = vsel %vm881, %v870, %v892
      %v904 = vsel %vm882, %v871, %v893
      %v905 = vpack.c.bf16 %v895, %v894
      %v906 = vpack.c.bf16 %v897, %v896
      %v907 = vpack.c.bf16 %v899, %v898
      %v908 = vpack.c.bf16 %v901, %v900
      %v909 = vpack.c.bf16 %v903, %v902
      %v910 = vpack.c.bf16 %v904, %v904
      %v917 = vunpack.c.l.b16 %v905
      %v918 = vunpack.c.h.b16 %v905
      %v919 = vunpack.c.l.b16 %v906
      %v920 = vunpack.c.h.b16 %v906
      %v921 = vunpack.c.l.b16 %v907
      %v922 = vunpack.c.h.b16 %v907
      %v923 = vunpack.c.l.b16 %v908
      %v924 = vunpack.c.h.b16 %v908
      %v925 = vunpack.c.l.b16 %v909
      %v926 = vunpack.c.h.b16 %v909
      %v927 = vunpack.c.l.b16 %v910
      %v928 = vpack.c.b16 %v917, %v917
      %v929 = vpack.c.b16 %v918, %v918
      %v930 = vpack.c.b16 %v919, %v919
      %v931 = vpack.c.b16 %v920, %v920
      %v932 = vpack.c.b16 %v921, %v921
      %v933 = vpack.c.b16 %v922, %v922
      %v934 = vpack.c.b16 %v923, %v923
      %v935 = vpack.c.b16 %v924, %v924
      %v936 = vpack.c.b16 %v925, %v925
      %v937 = vpack.c.b16 %v926, %v926
      %v938 = vpack.c.b16 %v927, %v927
      %vm950 = vcmask 257024
      %951 = vst.msk [vmem:[%s221] sm:$0xf] %vm950, %v928
      %952 = vst.msk [vmem:[%s221 + $0x4] sm:$0xf] %vm950, %v929
      %953 = vst.msk [vmem:[%s221 + $0x8] sm:$0xf] %vm950, %v930
      %954 = vst.msk [vmem:[%s221 + $0xc] sm:$0xf] %vm950, %v931
      %955 = vst.msk [vmem:[%s221 + $0x10] sm:$0xf] %vm950, %v932
      %956 = vst.msk [vmem:[%s221 + $0x14] sm:$0xf] %vm950, %v933
      %957 = vst.msk [vmem:[%s221 + $0x18] sm:$0xf] %vm950, %v934
      %958 = vst.msk [vmem:[%s221 + $0x1c] sm:$0xf] %vm950, %v935
      %959 = vst.msk [vmem:[%s221 + $0x20] sm:$0xf] %vm950, %v936
      %960 = vst.msk [vmem:[%s221 + $0x24] sm:$0xf] %vm950, %v937
      %vm961 = vcmask 257024
      %vm962 = vsmask.f32 3328
      %vm963 = vmand %vm961, %vm962
      %v964 = vld [vmem:[%s221 + $0x28] sm:$0xf]
      %v965 = vsel %vm963, %v938, %v964
      %966 = vst [vmem:[%s221 + $0x28] sm:$0xf] %v965
      %p967 = scmp.lt.s32.totalorder %s18, 1
      %s968 = scalar_select %p967, %s18, 1
      %p969 = scmp.lt.s32.totalorder %s19, 0
      %s970 = scalar_select %p969, %s19, 0
      %s971 = smul.addr %s968, 11
      %s972 = sadd.s32 %s970, %s971
      %s973 = smul.addr %s972, 4
      %s974 = scalar_lea.vmem %s3, %s973
      // Predicated region
      $region33: #{tpu_custom_call.1} parent=31 // pred_check
        %p975 = pneg %p124
      $region34: #{tpu_custom_call.1} parent=31 // pred_check_branch
        %977 = sbr.rel (%p975) target = $region36
      $region35: #{tpu_custom_call.1} parent=31 // pred_region
        _
      $region36: #{tpu_custom_call.1} parent=31 // pred_fallthru
        _
    $region32: #{tpu_custom_call.1} parent=5 // pred_fallthru
      _
    %p978 = scmp.le.s32.totalorder 2, %s9
    // Predicated region
    $region37: #{tpu_custom_call.1} parent=5 // pred_check
      %p979 = pneg %p978
    $region38: #{tpu_custom_call.1} parent=5 // pred_check_branch
      %981 = sbr.rel (%p979) target = $region40
    $region39: #{tpu_custom_call.1} parent=5 // pred_region
      %s982 = ssub.s32 %s9, 2
      // Predicated region
      $region41: #{tpu_custom_call.1} parent=39 // pred_check
        %p983 = pneg %p130
      $region42: #{tpu_custom_call.1} parent=39 // pred_check_branch
        %985 = sbr.rel (%p983) target = $region44
      $region43: #{tpu_custom_call.1} parent=39 // pred_region
        %p986 = scmp.lt.s32.totalorder %s20, 1
        %s987 = scalar_select %p986, %s20, 1
        %p988 = scmp.lt.s32.totalorder %s21, 0
        %s989 = scalar_select %p988, %s21, 0
        %s990 = smul.addr %s987, 11
        %s991 = sadd.s32 %s989, %s990
        %s992 = smul.addr %s991, 4
        %s993 = scalar_lea.vmem %s3, %s992
      $region44: #{tpu_custom_call.1} parent=39 // pred_fallthru
        _
    $region40: #{tpu_custom_call.1} parent=5 // pred_fallthru
      _
  $region6: #{tpu_custom_call.1} parent=0 // loop_footer
    %s13 = sadd.s32 1, %s9
  $region7: #{tpu_custom_call.1} parent=0 // loop_footer_branch
    %8 = sbr.rel target = $region3
  $region8: #{tpu_custom_call.1} parent=0 // loop_exit
    _

</llo_original>
